<compile_context>
chip_gen: v7x
topology: tpu7x:2x2x1
jax: 0.10.0
libtpu: 0.0.40
codegen_flags: <defaults>
</compile_context>

<pallas_src>
import functools

import jax
import jax.numpy as jnp
from jax.experimental import pallas as pl
from jax.experimental.pallas import tpu as pltpu

_LANE = 128          # vreg lane width
_SUBLANE_BF16 = 16   # bf16 packs 2 rows per sublane -> 16-row tiles stay unmasked


def _round_up(n: int, m: int) -> int:
    return ((n + m - 1) // m) * m


def _fused_mlp_kernel(*refs):
    """refs = (x_ref, w0, b0, w1, b1, ..., wL, bL, o_ref).

    x_ref: (tm, K0) batch tile; every (w, b) is fully VMEM-resident.
    Chains relu(x @ W + b); matmul inputs in bf16, accumulation + epilogue in
    f32, intermediates never leave on-chip memory.
    """
    x_ref = refs[0]
    o_ref = refs[-1]
    param_refs = refs[1:-1]
    n_layers = len(param_refs) // 2

    h = x_ref[...].astype(jnp.bfloat16)            # MXU wants bf16 inputs
    for li in range(n_layers):
        w_ref = param_refs[2 * li]
        b_ref = param_refs[2 * li + 1]
        y = jnp.dot(h, w_ref[...], preferred_element_type=jnp.float32)
        y = jnp.maximum(y + b_ref[...], 0.0)       # f32 epilogue (free under MXU slack)
        if li + 1 < n_layers:
            h = y.astype(jnp.bfloat16)             # downcast only for the next dot
        else:
            h = y
    o_ref[...] = h.astype(o_ref.dtype)


def prepare_mlp_encoder_params(params, param_dtype=jnp.bfloat16):
    """One-time prep: pad every layer to 128-lane multiples; weights -> bf16.

    Zero weight columns + zero bias give relu(0)=0, and the next layer's zero
    rows contribute exactly 0, so the padded network is numerically identical
    on the real columns.  Biases stay f32 (epilogue runs in f32).
    Returns (prepared_params, out_features).
    """
    prepared = []
    for w, b in params:
        kin, kout = w.shape
        kin_p, kout_p = _round_up(kin, _LANE), _round_up(kout, _LANE)
        w_p = jnp.pad(jnp.asarray(w, param_dtype),
                      ((0, kin_p - kin), (0, kout_p - kout)))
        b_p = jnp.pad(jnp.asarray(b, jnp.float32).reshape(1, -1),
                      ((0, 0), (0, kout_p - kout)))
        prepared.append((w_p, b_p))
    out_features = params[-1][0].shape[1]
    return prepared, out_features


@functools.partial(jax.jit, static_argnames=("out_features", "tm", "out_dtype"))
def mlp_encoder_forward(x, prepared_params, *, out_features, tm=512, out_dtype=None):
    """Full MlpEncoder forward as a single fused Pallas kernel.

    tm: batch rows per grid step.  512 is the default for throughput runs
        (sweep 256-1024; keep <=512 on v5e f32-heavy configs, <=1024-2048 bf16
        on v7x).  It is clamped / split for small batches.
    out_dtype: output dtype (default: x.dtype). Pass jnp.bfloat16 to halve the
        write-back stream if downstream accepts it.
    """
    M, K = x.shape
    out_dtype = x.dtype if out_dtype is None else jnp.dtype(out_dtype)

    k_pad = prepared_params[0][0].shape[0]   # padded input width
    n_pad = prepared_params[-1][0].shape[1]  # padded output width
    assert K <= k_pad, (K, k_pad)

    # Batch tile: 16-row aligned (bf16 sublane packing).  If the batch would
    # give a single grid step but is large enough to split, halve the tile so
    # v7x's second TensorCore has work (no effect on v5e/v6e, 1 TC).
    tm_eff = min(tm, _round_up(max(M, 1), _SUBLANE_BF16))
    if _round_up(M, tm_eff) // tm_eff < 2 and M >= 2 * _SUBLANE_BF16:
        tm_eff = _round_up(pl.cdiv(M, 2), _SUBLANE_BF16)
    m_pad = _round_up(M, tm_eff)

    # Avoid the wrapper-side pad copy of x when it isn't needed.
    if m_pad != M or k_pad != K:
        x_in = jnp.pad(x, ((0, m_pad - M), (0, k_pad - K)))
    else:
        x_in = x

    # Block specs: x/out tiled on batch; weights/biases constant across the
    # grid and single-buffered (double-buffering constants only wastes VMEM).
    resident = pl.Buffered(1)
    in_specs = [pl.BlockSpec((tm_eff, k_pad), lambda i: (i, 0))]
    flat_params = []
    for w, b in prepared_params:
        kin, kout = w.shape
        in_specs.append(pl.BlockSpec((kin, kout), lambda i: (0, 0),
                                     pipeline_mode=resident))
        in_specs.append(pl.BlockSpec((1, kout), lambda i: (0, 0),
                                     pipeline_mode=resident))
        flat_params += [w, b]

    # Explicit VMEM budget: 2x in-tile + 2x out-tile (double-buffered) +
    # single-buffered weights + margin for intermediates; capped at 48 MiB so
    # a large-tm sweep stays inside v7x's 64 MiB physical VMEM (and above the
    # 16/32 MiB default scoped limits of v5e/v6e).
    x_item = jnp.dtype(x.dtype).itemsize
    o_item = jnp.dtype(out_dtype).itemsize
    w_bytes = sum(int(w.size) * jnp.dtype(w.dtype).itemsize
                  + int(b.size) * jnp.dtype(b.dtype).itemsize
                  for w, b in prepared_params)
    tile_bytes = tm_eff * (k_pad * x_item + n_pad * o_item)
    vmem_limit = int(min(max(2 * tile_bytes + w_bytes + (8 << 20), 32 << 20),
                         48 << 20))

    out = pl.pallas_call(
        _fused_mlp_kernel,
        out_shape=jax.ShapeDtypeStruct((m_pad, n_pad), out_dtype),
        grid=(m_pad // tm_eff,),
        in_specs=in_specs,
        out_specs=pl.BlockSpec((tm_eff, n_pad), lambda i: (i, 0)),
        compiler_params=pltpu.CompilerParams(
            dimension_semantics=("parallel",),
            vmem_limit_bytes=vmem_limit),
    )(x_in, *flat_params)

    if m_pad != M or n_pad != out_features:
        out = out[:M, :out_features]
    return out


def mlp_encoder_layer_dims(in_features: int, initial_out_features: int, repeat: int):
    """Replicates MlpEncoder._create_mlp_encoder layer width schedule."""
    dims = [in_features, initial_out_features]
    repeat_half = repeat // 2
    out = initial_out_features
    for _ in range(repeat_half):
        out //= 2
        dims.append(out)
    for _ in range(repeat_half):
        out *= 2
        dims.append(out)
    dims.append(in_features)
    return dims


def init_mlp_encoder_params(key, in_features: int, initial_out_features: int,
                            repeat: int, dtype=jnp.float32):
    """Deterministic synthetic init (PyTorch-style uniform +-1/sqrt(fan_in))."""
    dims = mlp_encoder_layer_dims(in_features, initial_out_features, repeat)
    params = []
    for fan_in, fan_out in zip(dims[:-1], dims[1:]):
        key, kw, kb = jax.random.split(key, 3)
        bound = 1.0 / (fan_in ** 0.5)
        # stored as (in, out) == PyTorch weight (out, in) transposed
        w = jax.random.uniform(kw, (fan_in, fan_out), dtype, -bound, bound)
        b = jax.random.uniform(kb, (1, fan_out), dtype, -bound, bound)
        params.append((w, b))
    return params


def _reference(x, params, matmul_dtype):
    """Pure-JAX reference; matmul_dtype=bf16 mimics the kernel numerics."""
    h = x
    for w, b in params:
        y = jnp.dot(h.astype(matmul_dtype), w.astype(matmul_dtype),
                    preferred_element_type=jnp.float32) + b.reshape(1, -1)
        h = jnp.maximum(y, 0.0)
    return h


if __name__ == "__main__":
    # in_features=512, initial_out=128, repeat=4
    # -> widths 512 -> 128 -> 64 -> 32 -> 64 -> 128 -> 512 (6 Linear+ReLU layers).
    IN_FEATURES = 512
    INITIAL_OUT = 128
    REPEAT = 4
    BATCH = 8

    key = jax.random.PRNGKey(0)
    kx, kp = jax.random.split(key)
    x = jax.random.normal(kx, (BATCH, IN_FEATURES), jnp.float32)
    params = init_mlp_encoder_params(kp, IN_FEATURES, INITIAL_OUT, REPEAT)
    prepared, out_features = prepare_mlp_encoder_params(params)

    out = mlp_encoder_forward(x, prepared, out_features=out_features, tm=512)
    out = jax.block_until_ready(out)
    assert out.shape == (BATCH, IN_FEATURES), out.shape

    # Check 1: against a reference that mimics the kernel numerics
    # (bf16 matmul inputs, f32 accumulation) -> tight tolerance.
    ref_bf16 = _reference(x, params, jnp.bfloat16)
    assert jnp.allclose(out, ref_bf16, atol=5e-3, rtol=5e-3), \
        "mismatch vs bf16-emulated reference"
    # Check 2: against the pure-f32 PyTorch semantics -> loose tolerance
    # (bf16 matmul inputs keep relative error at the ~1e-2 level).
    ref_f32 = _reference(x, params, jnp.float32)
    assert jnp.allclose(out, ref_f32, atol=5e-2, rtol=5e-2), \
        "mismatch vs f32 reference"

    # Exercise the multi-step grid / v7x dual-TC path (tile split + batch pad).
    x2 = jax.random.normal(jax.random.PRNGKey(1), (40, IN_FEATURES), jnp.float32)
    out2 = jax.block_until_ready(
        mlp_encoder_forward(x2, prepared, out_features=out_features, tm=512))
    assert out2.shape == (40, IN_FEATURES), out2.shape
    assert jnp.allclose(out2, _reference(x2, params, jnp.bfloat16),
                        atol=5e-3, rtol=5e-3), "mismatch on multi-tile batch"

    print("KERNEL_OK")
</pallas_src>

<mosaic_0001>
module attributes {stable_mosaic.version = 11 : i64} {
  func.func @_fused_mlp_kernel(%arg0: i32, %arg1: memref<16x512xf32, #tpu.memory_space<vmem>>, %arg2: memref<512x128xbf16, #tpu.memory_space<vmem>>, %arg3: memref<1x128xf32, #tpu.memory_space<vmem>>, %arg4: memref<128x128xbf16, #tpu.memory_space<vmem>>, %arg5: memref<1x128xf32, #tpu.memory_space<vmem>>, %arg6: memref<128x128xbf16, #tpu.memory_space<vmem>>, %arg7: memref<1x128xf32, #tpu.memory_space<vmem>>, %arg8: memref<128x128xbf16, #tpu.memory_space<vmem>>, %arg9: memref<1x128xf32, #tpu.memory_space<vmem>>, %arg10: memref<128x128xbf16, #tpu.memory_space<vmem>>, %arg11: memref<1x128xf32, #tpu.memory_space<vmem>>, %arg12: memref<128x512xbf16, #tpu.memory_space<vmem>>, %arg13: memref<1x512xf32, #tpu.memory_space<vmem>>, %arg14: memref<16x512xf32, #tpu.memory_space<vmem>>) attributes {dimension_semantics = [#tpu.dimension_semantics<parallel>], iteration_bounds = array<i64: 1>, scalar_prefetch = 0 : i64, scratch_operands = 0 : i64, tpu.core_type = #tpu.core_type<tc>, window_params = [{transform_indices = @transform_0, window_bounds = array<i64: 16, 512>}, {pipeline_mode = #tpu.pipeline_mode<synchronous>, transform_indices = @transform_1, window_bounds = array<i64: 512, 128>}, {pipeline_mode = #tpu.pipeline_mode<synchronous>, transform_indices = @transform_2, window_bounds = array<i64: 1, 128>}, {pipeline_mode = #tpu.pipeline_mode<synchronous>, transform_indices = @transform_3, window_bounds = array<i64: 128, 128>}, {pipeline_mode = #tpu.pipeline_mode<synchronous>, transform_indices = @transform_4, window_bounds = array<i64: 1, 128>}, {pipeline_mode = #tpu.pipeline_mode<synchronous>, transform_indices = @transform_5, window_bounds = array<i64: 128, 128>}, {pipeline_mode = #tpu.pipeline_mode<synchronous>, transform_indices = @transform_6, window_bounds = array<i64: 1, 128>}, {pipeline_mode = #tpu.pipeline_mode<synchronous>, transform_indices = @transform_7, window_bounds = array<i64: 128, 128>}, {pipeline_mode = #tpu.pipeline_mode<synchronous>, transform_indices = @transform_8, window_bounds = array<i64: 1, 128>}, {pipeline_mode = #tpu.pipeline_mode<synchronous>, transform_indices = @transform_9, window_bounds = array<i64: 128, 128>}, {pipeline_mode = #tpu.pipeline_mode<synchronous>, transform_indices = @transform_10, window_bounds = array<i64: 1, 128>}, {pipeline_mode = #tpu.pipeline_mode<synchronous>, transform_indices = @transform_11, window_bounds = array<i64: 128, 512>}, {pipeline_mode = #tpu.pipeline_mode<synchronous>, transform_indices = @transform_12, window_bounds = array<i64: 1, 512>}, {transform_indices = @transform_13, window_bounds = array<i64: 16, 512>}]} {
    %c0 = arith.constant 0 : index
    %c0_0 = arith.constant 0 : index
    %0 = vector.load %arg1[%c0, %c0_0] : memref<16x512xf32, #tpu.memory_space<vmem>>, vector<16x512xf32>
    %1 = arith.truncf %0 : vector<16x512xf32> to vector<16x512xbf16>
    %c0_1 = arith.constant 0 : index
    %c0_2 = arith.constant 0 : index
    %2 = vector.load %arg2[%c0_1, %c0_2] : memref<512x128xbf16, #tpu.memory_space<vmem>>, vector<512x128xbf16>
    %cst = arith.constant dense<0.000000e+00> : vector<16x128xf32>
    %3 = tpu.matmul %1, %2, %cst {dimension_numbers = #tpu.dot_dimension_numbers<[1], [0], [0], [1], [0, 0, 1, 1], [], []>} : vector<16x512xbf16>, vector<512x128xbf16>, vector<16x128xf32> -> vector<16x128xf32>
    %c0_3 = arith.constant 0 : index
    %c0_4 = arith.constant 0 : index
    %4 = vector.load %arg3[%c0_3, %c0_4] : memref<1x128xf32, #tpu.memory_space<vmem>>, vector<1x128xf32>
    %5 = vector.broadcast %4 : vector<1x128xf32> to vector<16x128xf32>
    %6 = arith.addf %3, %5 : vector<16x128xf32>
    %cst_5 = arith.constant 0.000000e+00 : f32
    %7 = vector.broadcast %cst_5 : f32 to vector<16x128xf32>
    %8 = arith.maximumf %6, %7 : vector<16x128xf32>
    %9 = arith.truncf %8 : vector<16x128xf32> to vector<16x128xbf16>
    %c0_6 = arith.constant 0 : index
    %c0_7 = arith.constant 0 : index
    %10 = vector.load %arg4[%c0_6, %c0_7] : memref<128x128xbf16, #tpu.memory_space<vmem>>, vector<128x128xbf16>
    %cst_8 = arith.constant dense<0.000000e+00> : vector<16x128xf32>
    %11 = tpu.matmul %9, %10, %cst_8 {dimension_numbers = #tpu.dot_dimension_numbers<[1], [0], [0], [1], [0, 0, 1, 1], [], []>} : vector<16x128xbf16>, vector<128x128xbf16>, vector<16x128xf32> -> vector<16x128xf32>
    %c0_9 = arith.constant 0 : index
    %c0_10 = arith.constant 0 : index
    %12 = vector.load %arg5[%c0_9, %c0_10] : memref<1x128xf32, #tpu.memory_space<vmem>>, vector<1x128xf32>
    %13 = vector.broadcast %12 : vector<1x128xf32> to vector<16x128xf32>
    %14 = arith.addf %11, %13 : vector<16x128xf32>
    %cst_11 = arith.constant 0.000000e+00 : f32
    %15 = vector.broadcast %cst_11 : f32 to vector<16x128xf32>
    %16 = arith.maximumf %14, %15 : vector<16x128xf32>
    %17 = arith.truncf %16 : vector<16x128xf32> to vector<16x128xbf16>
    %c0_12 = arith.constant 0 : index
    %c0_13 = arith.constant 0 : index
    %18 = vector.load %arg6[%c0_12, %c0_13] : memref<128x128xbf16, #tpu.memory_space<vmem>>, vector<128x128xbf16>
    %cst_14 = arith.constant dense<0.000000e+00> : vector<16x128xf32>
    %19 = tpu.matmul %17, %18, %cst_14 {dimension_numbers = #tpu.dot_dimension_numbers<[1], [0], [0], [1], [0, 0, 1, 1], [], []>} : vector<16x128xbf16>, vector<128x128xbf16>, vector<16x128xf32> -> vector<16x128xf32>
    %c0_15 = arith.constant 0 : index
    %c0_16 = arith.constant 0 : index
    %20 = vector.load %arg7[%c0_15, %c0_16] : memref<1x128xf32, #tpu.memory_space<vmem>>, vector<1x128xf32>
    %21 = vector.broadcast %20 : vector<1x128xf32> to vector<16x128xf32>
    %22 = arith.addf %19, %21 : vector<16x128xf32>
    %cst_17 = arith.constant 0.000000e+00 : f32
    %23 = vector.broadcast %cst_17 : f32 to vector<16x128xf32>
    %24 = arith.maximumf %22, %23 : vector<16x128xf32>
    %25 = arith.truncf %24 : vector<16x128xf32> to vector<16x128xbf16>
    %c0_18 = arith.constant 0 : index
    %c0_19 = arith.constant 0 : index
    %26 = vector.load %arg8[%c0_18, %c0_19] : memref<128x128xbf16, #tpu.memory_space<vmem>>, vector<128x128xbf16>
    %cst_20 = arith.constant dense<0.000000e+00> : vector<16x128xf32>
    %27 = tpu.matmul %25, %26, %cst_20 {dimension_numbers = #tpu.dot_dimension_numbers<[1], [0], [0], [1], [0, 0, 1, 1], [], []>} : vector<16x128xbf16>, vector<128x128xbf16>, vector<16x128xf32> -> vector<16x128xf32>
    %c0_21 = arith.constant 0 : index
    %c0_22 = arith.constant 0 : index
    %28 = vector.load %arg9[%c0_21, %c0_22] : memref<1x128xf32, #tpu.memory_space<vmem>>, vector<1x128xf32>
    %29 = vector.broadcast %28 : vector<1x128xf32> to vector<16x128xf32>
    %30 = arith.addf %27, %29 : vector<16x128xf32>
    %cst_23 = arith.constant 0.000000e+00 : f32
    %31 = vector.broadcast %cst_23 : f32 to vector<16x128xf32>
    %32 = arith.maximumf %30, %31 : vector<16x128xf32>
    %33 = arith.truncf %32 : vector<16x128xf32> to vector<16x128xbf16>
    %c0_24 = arith.constant 0 : index
    %c0_25 = arith.constant 0 : index
    %34 = vector.load %arg10[%c0_24, %c0_25] : memref<128x128xbf16, #tpu.memory_space<vmem>>, vector<128x128xbf16>
    %cst_26 = arith.constant dense<0.000000e+00> : vector<16x128xf32>
    %35 = tpu.matmul %33, %34, %cst_26 {dimension_numbers = #tpu.dot_dimension_numbers<[1], [0], [0], [1], [0, 0, 1, 1], [], []>} : vector<16x128xbf16>, vector<128x128xbf16>, vector<16x128xf32> -> vector<16x128xf32>
    %c0_27 = arith.constant 0 : index
    %c0_28 = arith.constant 0 : index
    %36 = vector.load %arg11[%c0_27, %c0_28] : memref<1x128xf32, #tpu.memory_space<vmem>>, vector<1x128xf32>
    %37 = vector.broadcast %36 : vector<1x128xf32> to vector<16x128xf32>
    %38 = arith.addf %35, %37 : vector<16x128xf32>
    %cst_29 = arith.constant 0.000000e+00 : f32
    %39 = vector.broadcast %cst_29 : f32 to vector<16x128xf32>
    %40 = arith.maximumf %38, %39 : vector<16x128xf32>
    %41 = arith.truncf %40 : vector<16x128xf32> to vector<16x128xbf16>
    %c0_30 = arith.constant 0 : index
    %c0_31 = arith.constant 0 : index
    %42 = vector.load %arg12[%c0_30, %c0_31] : memref<128x512xbf16, #tpu.memory_space<vmem>>, vector<128x512xbf16>
    %cst_32 = arith.constant dense<0.000000e+00> : vector<16x512xf32>
    %43 = tpu.matmul %41, %42, %cst_32 {dimension_numbers = #tpu.dot_dimension_numbers<[1], [0], [0], [1], [0, 0, 1, 1], [], []>} : vector<16x128xbf16>, vector<128x512xbf16>, vector<16x512xf32> -> vector<16x512xf32>
    %c0_33 = arith.constant 0 : index
    %c0_34 = arith.constant 0 : index
    %44 = vector.load %arg13[%c0_33, %c0_34] : memref<1x512xf32, #tpu.memory_space<vmem>>, vector<1x512xf32>
    %45 = vector.broadcast %44 : vector<1x512xf32> to vector<16x512xf32>
    %46 = arith.addf %43, %45 : vector<16x512xf32>
    %cst_35 = arith.constant 0.000000e+00 : f32
    %47 = vector.broadcast %cst_35 : f32 to vector<16x512xf32>
    %48 = arith.maximumf %46, %47 : vector<16x512xf32>
    %c0_36 = arith.constant 0 : index
    %c0_37 = arith.constant 0 : index
    %49 = vector.load %arg14[%c0_36, %c0_37] : memref<16x512xf32, #tpu.memory_space<vmem>>, vector<16x512xf32>
    tpu.vector_store %arg14[%c0_36, %c0_37], %48 {strides = array<i32>} : memref<16x512xf32, #tpu.memory_space<vmem>>, vector<16x512xf32>,
    return
  }
  func.func @transform_0(%arg0: i32) -> (i32, i32) {
    %c0_i32 = arith.constant 0 : i32
    %c0_i32_0 = arith.constant 0 : i32
    return %arg0, %c0_i32 : i32, i32
  }
  func.func @transform_1(%arg0: i32) -> (i32, i32) {
    %c0_i32 = arith.constant 0 : i32
    %c0_i32_0 = arith.constant 0 : i32
    %c0_i32_1 = arith.constant 0 : i32
    return %c0_i32, %c0_i32_0 : i32, i32
  }
  func.func @transform_2(%arg0: i32) -> (i32, i32) {
    %c0_i32 = arith.constant 0 : i32
    %c0_i32_0 = arith.constant 0 : i32
    %c0_i32_1 = arith.constant 0 : i32
    return %c0_i32, %c0_i32_0 : i32, i32
  }
  func.func @transform_3(%arg0: i32) -> (i32, i32) {
    %c0_i32 = arith.constant 0 : i32
    %c0_i32_0 = arith.constant 0 : i32
    %c0_i32_1 = arith.constant 0 : i32
    return %c0_i32, %c0_i32_0 : i32, i32
  }
  func.func @transform_4(%arg0: i32) -> (i32, i32) {
    %c0_i32 = arith.constant 0 : i32
    %c0_i32_0 = arith.constant 0 : i32
    %c0_i32_1 = arith.constant 0 : i32
    return %c0_i32, %c0_i32_0 : i32, i32
  }
  func.func @transform_5(%arg0: i32) -> (i32, i32) {
    %c0_i32 = arith.constant 0 : i32
    %c0_i32_0 = arith.constant 0 : i32
    %c0_i32_1 = arith.constant 0 : i32
    return %c0_i32, %c0_i32_0 : i32, i32
  }
  func.func @transform_6(%arg0: i32) -> (i32, i32) {
    %c0_i32 = arith.constant 0 : i32
    %c0_i32_0 = arith.constant 0 : i32
    %c0_i32_1 = arith.constant 0 : i32
    return %c0_i32, %c0_i32_0 : i32, i32
  }
  func.func @transform_7(%arg0: i32) -> (i32, i32) {
    %c0_i32 = arith.constant 0 : i32
    %c0_i32_0 = arith.constant 0 : i32
    %c0_i32_1 = arith.constant 0 : i32
    return %c0_i32, %c0_i32_0 : i32, i32
  }
  func.func @transform_8(%arg0: i32) -> (i32, i32) {
    %c0_i32 = arith.constant 0 : i32
    %c0_i32_0 = arith.constant 0 : i32
    %c0_i32_1 = arith.constant 0 : i32
    return %c0_i32, %c0_i32_0 : i32, i32
  }
  func.func @transform_9(%arg0: i32) -> (i32, i32) {
    %c0_i32 = arith.constant 0 : i32
    %c0_i32_0 = arith.constant 0 : i32
    %c0_i32_1 = arith.constant 0 : i32
    return %c0_i32, %c0_i32_0 : i32, i32
  }
  func.func @transform_10(%arg0: i32) -> (i32, i32) {
    %c0_i32 = arith.constant 0 : i32
    %c0_i32_0 = arith.constant 0 : i32
    %c0_i32_1 = arith.constant 0 : i32
    return %c0_i32, %c0_i32_0 : i32, i32
  }
  func.func @transform_11(%arg0: i32) -> (i32, i32) {
    %c0_i32 = arith.constant 0 : i32
    %c0_i32_0 = arith.constant 0 : i32
    %c0_i32_1 = arith.constant 0 : i32
    return %c0_i32, %c0_i32_0 : i32, i32
  }
  func.func @transform_12(%arg0: i32) -> (i32, i32) {
    %c0_i32 = arith.constant 0 : i32
    %c0_i32_0 = arith.constant 0 : i32
    %c0_i32_1 = arith.constant 0 : i32
    return %c0_i32, %c0_i32_0 : i32, i32
  }
  func.func @transform_13(%arg0: i32) -> (i32, i32) {
    %c0_i32 = arith.constant 0 : i32
    %c0_i32_0 = arith.constant 0 : i32
    return %arg0, %c0_i32 : i32, i32
  }
}

</mosaic_0001>

<llo_original>
// kernel: mlp_encoder_forward.1
$region0: #{mlp_encoder_forward.1}
  #allocation0 [shape = 'u32[]', space=smem, size = 0x4, offset = 0x4, fixed_abs, tag = 'smem constant byte address 0x4 - core index']
  #allocation1 [shape = 'u32[144,128]{1,0:T(1,128)}', space=vmem, size = 0x12000, scoped, tag = 'internal scratch']
  %s0 = inlined_call_operand.vmem [shape: f32[16,512], index: 0, kind: input, shape index: {}]
  %s1 = inlined_call_operand.hbm [shape: bf16[512,128], index: 1, kind: input, shape index: {}]
  %s2 = inlined_call_operand.vmem [shape: f32[1,128], index: 2, kind: input, shape index: {}]
  %s3 = inlined_call_operand.vmem [shape: bf16[128,128], index: 3, kind: input, shape index: {}]
  %s4 = inlined_call_operand.vmem [shape: f32[1,128], index: 4, kind: input, shape index: {}]
  %s5 = inlined_call_operand.hbm [shape: bf16[128,128], index: 5, kind: input, shape index: {}]
  %s6 = inlined_call_operand.hbm [shape: f32[1,128], index: 6, kind: input, shape index: {}]
  %s7 = inlined_call_operand.hbm [shape: bf16[128,128], index: 7, kind: input, shape index: {}]
  %s8 = inlined_call_operand.hbm [shape: f32[1,128], index: 8, kind: input, shape index: {}]
  %s9 = inlined_call_operand.vmem [shape: bf16[128,128], index: 9, kind: input, shape index: {}]
  %s10 = inlined_call_operand.hbm [shape: f32[1,128], index: 10, kind: input, shape index: {}]
  %s11 = inlined_call_operand.hbm [shape: bf16[128,512], index: 11, kind: input, shape index: {}]
  %s12 = inlined_call_operand.vmem [shape: f32[1,512], index: 12, kind: input, shape index: {}]
  %s13 = inlined_call_operand.vmem [shape: f32[16,512], index: 13, kind: output, shape index: {}]
  %s14 = sld [smem:[#allocation0]]
  $region90: #{mlp_encoder_forward.1} parent=0
    _
  %s16 = ssub.s32 1, %s14
  %s17 = scalar_select 0, %s16, %s14
  $region1: #{mlp_encoder_forward.1} parent=0
    #allocation2 [shape = 'u8[131072]{0}', space=vmem, size = 0x20000, scoped, tag = 'input window, operand 1, single buffered']
    #allocation3 [shape = 's32[1]{0}', space=sflag, size = 0x4, scoped, tag = 'scoped memory for mlp_encoder_forward.1']
    #allocation4 [shape = 'u8[32768]{0}', space=vmem, size = 0x8000, scoped, tag = 'input window, operand 5, single buffered']
    #allocation5 [shape = 's32[1]{0}', space=sflag, size = 0x4, scoped, tag = 'scoped memory for mlp_encoder_forward.1']
    #allocation6 [shape = 'u8[512]{0}', space=vmem, size = 0x400, scoped, tag = 'input window, operand 6, single buffered']
    #allocation7 [shape = 'u8[32768]{0}', space=vmem, size = 0x8000, scoped, tag = 'input window, operand 7, single buffered']
    #allocation8 [shape = 's32[1]{0}', space=sflag, size = 0x4, scoped, tag = 'scoped memory for mlp_encoder_forward.1']
    #allocation9 [shape = 'u8[512]{0}', space=vmem, size = 0x400, scoped, tag = 'input window, operand 8, single buffered']
    #allocation10 [shape = 'u8[512]{0}', space=vmem, size = 0x400, scoped, tag = 'input window, operand 10, single buffered']
    #allocation11 [shape = 's32[1]{0}', space=sflag, size = 0x4, scoped, tag = 'scoped memory for mlp_encoder_forward.1']
    #allocation12 [shape = 'u8[131072]{0}', space=vmem, size = 0x20000, scoped, tag = 'input window, operand 11, single buffered']
    %18 = vsyncpa [#allocation3], 0
    %19 = vsyncpa [#allocation5], 0
    %20 = vsyncpa [#allocation8], 0
    %21 = vsyncpa [#allocation11], 0
    // Predicated region
    $region2: #{mlp_encoder_forward.1} parent=1 // pred_check
      _
    $region3: #{mlp_encoder_forward.1} parent=1 // pred_check_branch
      %23 = sbr.rel (0) target = $region5
    $region4: #{mlp_encoder_forward.1} parent=1 // pred_region
      _
    $region5: #{mlp_encoder_forward.1} parent=1 // pred_fallthru
      _
    // Predicated region
    $region6: #{mlp_encoder_forward.1} parent=1 // pred_check
      _
    $region7: #{mlp_encoder_forward.1} parent=1 // pred_check_branch
      %25 = sbr.rel (0) target = $region9
    $region8: #{mlp_encoder_forward.1} parent=1 // pred_region
      %s27 = ssub.s32 4096, 4096
      %28 = vsyncadd [#allocation3], %s27
      %s29 = sshll.u32 [#allocation2], 4
      %s30 = int_to_ptr.vmem [resolvable:$true] %s29
      %35 = dma.hbm_to_vmem [thread:$0]  %s1, 4096, %s30, [#allocation3], 64, 64, 4
    $region9: #{mlp_encoder_forward.1} parent=1 // pred_fallthru
      _
    // Predicated region
    $region10: #{mlp_encoder_forward.1} parent=1 // pred_check
      _
    $region11: #{mlp_encoder_forward.1} parent=1 // pred_check_branch
      %37 = sbr.rel (0) target = $region13
    $region12: #{mlp_encoder_forward.1} parent=1 // pred_region
      _
    $region13: #{mlp_encoder_forward.1} parent=1 // pred_fallthru
      _
    // Predicated region
    $region14: #{mlp_encoder_forward.1} parent=1 // pred_check
      _
    $region15: #{mlp_encoder_forward.1} parent=1 // pred_check_branch
      %39 = sbr.rel (0) target = $region17
    $region16: #{mlp_encoder_forward.1} parent=1 // pred_region
      _
    $region17: #{mlp_encoder_forward.1} parent=1 // pred_fallthru
      _
    // Predicated region
    $region18: #{mlp_encoder_forward.1} parent=1 // pred_check
      _
    $region19: #{mlp_encoder_forward.1} parent=1 // pred_check_branch
      %41 = sbr.rel (0) target = $region21
    $region20: #{mlp_encoder_forward.1} parent=1 // pred_region
      _
    $region21: #{mlp_encoder_forward.1} parent=1 // pred_fallthru
      _
    // Predicated region
    $region22: #{mlp_encoder_forward.1} parent=1 // pred_check
      _
    $region23: #{mlp_encoder_forward.1} parent=1 // pred_check_branch
      %43 = sbr.rel (0) target = $region25
    $region24: #{mlp_encoder_forward.1} parent=1 // pred_region
      %s45 = ssub.s32 1024, 1024
      %46 = vsyncadd [#allocation5], %s45
      %s47 = sshll.u32 [#allocation4], 4
      %s48 = int_to_ptr.vmem [resolvable:$true] %s47
      %53 = dma.hbm_to_vmem [thread:$0]  %s5, 1024, %s48, [#allocation5], 64, 64, 4
    $region25: #{mlp_encoder_forward.1} parent=1 // pred_fallthru
      _
    // Predicated region
    $region26: #{mlp_encoder_forward.1} parent=1 // pred_check
      _
    $region27: #{mlp_encoder_forward.1} parent=1 // pred_check_branch
      %55 = sbr.rel (0) target = $region29
    $region28: #{mlp_encoder_forward.1} parent=1 // pred_region
      %s57 = ssub.s32 16, 16
      %58 = vsyncadd [#allocation5], %s57
      %s60 = sshll.u32 [#allocation6], 4
      %s61 = int_to_ptr.vmem [resolvable:$true] %s60
      %63 = dma.hbm_to_vmem [thread:$0]  %s6, 16, %s61, [#allocation5]
    $region29: #{mlp_encoder_forward.1} parent=1 // pred_fallthru
      _
    // Predicated region
    $region30: #{mlp_encoder_forward.1} parent=1 // pred_check
      _
    $region31: #{mlp_encoder_forward.1} parent=1 // pred_check_branch
      %65 = sbr.rel (0) target = $region33
    $region32: #{mlp_encoder_forward.1} parent=1 // pred_region
      %s67 = ssub.s32 1024, 1024
      %68 = vsyncadd [#allocation8], %s67
      %s69 = sshll.u32 [#allocation7], 4
      %s70 = int_to_ptr.vmem [resolvable:$true] %s69
      %75 = dma.hbm_to_vmem [thread:$0]  %s7, 1024, %s70, [#allocation8], 64, 64, 4
    $region33: #{mlp_encoder_forward.1} parent=1 // pred_fallthru
      _
    // Predicated region
    $region34: #{mlp_encoder_forward.1} parent=1 // pred_check
      _
    $region35: #{mlp_encoder_forward.1} parent=1 // pred_check_branch
      %77 = sbr.rel (0) target = $region37
    $region36: #{mlp_encoder_forward.1} parent=1 // pred_region
      %s79 = ssub.s32 16, 16
      %80 = vsyncadd [#allocation8], %s79
      %s82 = sshll.u32 [#allocation9], 4
      %s83 = int_to_ptr.vmem [resolvable:$true] %s82
      %85 = dma.hbm_to_vmem [thread:$0]  %s8, 16, %s83, [#allocation8]
    $region37: #{mlp_encoder_forward.1} parent=1 // pred_fallthru
      _
    // Predicated region
    $region38: #{mlp_encoder_forward.1} parent=1 // pred_check
      _
    $region39: #{mlp_encoder_forward.1} parent=1 // pred_check_branch
      %87 = sbr.rel (0) target = $region41
    $region40: #{mlp_encoder_forward.1} parent=1 // pred_region
      _
    $region41: #{mlp_encoder_forward.1} parent=1 // pred_fallthru
      _
    // Predicated region
    $region42: #{mlp_encoder_forward.1} parent=1 // pred_check
      _
    $region43: #{mlp_encoder_forward.1} parent=1 // pred_check_branch
      %89 = sbr.rel (0) target = $region45
    $region44: #{mlp_encoder_forward.1} parent=1 // pred_region
      %s91 = ssub.s32 16, 16
      %92 = vsyncadd [#allocation11], %s91
      %s94 = sshll.u32 [#allocation10], 4
      %s95 = int_to_ptr.vmem [resolvable:$true] %s94
      %97 = dma.hbm_to_vmem [thread:$0]  %s10, 16, %s95, [#allocation11]
    $region45: #{mlp_encoder_forward.1} parent=1 // pred_fallthru
      _
    // Predicated region
    $region46: #{mlp_encoder_forward.1} parent=1 // pred_check
      _
    $region47: #{mlp_encoder_forward.1} parent=1 // pred_check_branch
      %99 = sbr.rel (0) target = $region49
    $region48: #{mlp_encoder_forward.1} parent=1 // pred_region
      %s101 = ssub.s32 4096, 4096
      %102 = vsyncadd [#allocation11], %s101
      %s103 = sshll.u32 [#allocation12], 4
      %s104 = int_to_ptr.vmem [resolvable:$true] %s103
      %109 = dma.hbm_to_vmem [thread:$0]  %s11, 4096, %s104, [#allocation11], 256, 256, 16
    $region49: #{mlp_encoder_forward.1} parent=1 // pred_fallthru
      _
    // Predicated region
    $region50: #{mlp_encoder_forward.1} parent=1 // pred_check
      _
    $region51: #{mlp_encoder_forward.1} parent=1 // pred_check_branch
      %111 = sbr.rel (0) target = $region53
    $region52: #{mlp_encoder_forward.1} parent=1 // pred_region
      _
    $region53: #{mlp_encoder_forward.1} parent=1 // pred_fallthru
      _
    // Predicated region
    $region54: #{mlp_encoder_forward.1} parent=1 // pred_check
      _
    $region55: #{mlp_encoder_forward.1} parent=1 // pred_check_branch
      %113 = sbr.rel (0) target = $region57
    $region56: #{mlp_encoder_forward.1} parent=1 // pred_region
      %114 = dma.done [#allocation3], 4096
    $region57: #{mlp_encoder_forward.1} parent=1 // pred_fallthru
      _
    // Predicated region
    $region58: #{mlp_encoder_forward.1} parent=1 // pred_check
      _
    $region59: #{mlp_encoder_forward.1} parent=1 // pred_check_branch
      %116 = sbr.rel (0) target = $region61
    $region60: #{mlp_encoder_forward.1} parent=1 // pred_region
      %117 = dma.done [#allocation5], 1024
    $region61: #{mlp_encoder_forward.1} parent=1 // pred_fallthru
      _
    // Predicated region
    $region62: #{mlp_encoder_forward.1} parent=1 // pred_check
      _
    $region63: #{mlp_encoder_forward.1} parent=1 // pred_check_branch
      %119 = sbr.rel (0) target = $region65
    $region64: #{mlp_encoder_forward.1} parent=1 // pred_region
      %120 = dma.done [#allocation5], 16
    $region65: #{mlp_encoder_forward.1} parent=1 // pred_fallthru
      _
    // Predicated region
    $region66: #{mlp_encoder_forward.1} parent=1 // pred_check
      _
    $region67: #{mlp_encoder_forward.1} parent=1 // pred_check_branch
      %122 = sbr.rel (0) target = $region69
    $region68: #{mlp_encoder_forward.1} parent=1 // pred_region
      %123 = dma.done [#allocation8], 1024
    $region69: #{mlp_encoder_forward.1} parent=1 // pred_fallthru
      _
    // Predicated region
    $region70: #{mlp_encoder_forward.1} parent=1 // pred_check
      _
    $region71: #{mlp_encoder_forward.1} parent=1 // pred_check_branch
      %125 = sbr.rel (0) target = $region73
    $region72: #{mlp_encoder_forward.1} parent=1 // pred_region
      %126 = dma.done [#allocation8], 16
    $region73: #{mlp_encoder_forward.1} parent=1 // pred_fallthru
      _
    // Predicated region
    $region74: #{mlp_encoder_forward.1} parent=1 // pred_check
      _
    $region75: #{mlp_encoder_forward.1} parent=1 // pred_check_branch
      %128 = sbr.rel (0) target = $region77
    $region76: #{mlp_encoder_forward.1} parent=1 // pred_region
      %129 = dma.done [#allocation11], 16
    $region77: #{mlp_encoder_forward.1} parent=1 // pred_fallthru
      _
    // Predicated region
    $region78: #{mlp_encoder_forward.1} parent=1 // pred_check
      _
    $region79: #{mlp_encoder_forward.1} parent=1 // pred_check_branch
      %131 = sbr.rel (0) target = $region81
    $region80: #{mlp_encoder_forward.1} parent=1 // pred_region
      %132 = dma.done [#allocation11], 4096
    $region81: #{mlp_encoder_forward.1} parent=1 // pred_fallthru
      _
    %v134 = vld [vmem:[%s0] sm:$0xff]
    %v135 = vld [vmem:[%s0 + $0x8] sm:$0xff]
    %v136 = vld [vmem:[%s0 + $0x10] sm:$0xff]
    %v137 = vld [vmem:[%s0 + $0x18] sm:$0xff]
    %v138 = vld [vmem:[%s0 + $0x20] sm:$0xff]
    %v139 = vld [vmem:[%s0 + $0x28] sm:$0xff]
    %v140 = vld [vmem:[%s0 + $0x30] sm:$0xff]
    %v141 = vld [vmem:[%s0 + $0x38] sm:$0xff]
    %v142 = vpack.c.bf16 %v138, %v134
    %v143 = vpack.c.bf16 %v139, %v135
    %v144 = vpack.c.bf16 %v140, %v136
    %v145 = vpack.c.bf16 %v141, %v137
    %v146 = vld [vmem:[#allocation2] sm:$0xf]
    %v147 = vld [vmem:[#allocation2 + $0x4] sm:$0xf]
    %v148 = vld [vmem:[#allocation2 + $0x8] sm:$0xf]
    %v149 = vld [vmem:[#allocation2 + $0xc] sm:$0xf]
    %v150 = vld [vmem:[#allocation2 + $0x10] sm:$0xf]
    %v151 = vld [vmem:[#allocation2 + $0x14] sm:$0xf]
    %v152 = vld [vmem:[#allocation2 + $0x18] sm:$0xf]
    %v153 = vld [vmem:[#allocation2 + $0x1c] sm:$0xf]
    %v154 = vld [vmem:[#allocation2 + $0x20] sm:$0xf]
    %v155 = vld [vmem:[#allocation2 + $0x24] sm:$0xf]
    %v156 = vld [vmem:[#allocation2 + $0x28] sm:$0xf]
    %v157 = vld [vmem:[#allocation2 + $0x2c] sm:$0xf]
    %v158 = vld [vmem:[#allocation2 + $0x30] sm:$0xf]
    %v159 = vld [vmem:[#allocation2 + $0x34] sm:$0xf]
    %v160 = vld [vmem:[#allocation2 + $0x38] sm:$0xf]
    %v161 = vld [vmem:[#allocation2 + $0x3c] sm:$0xf]
    %v162 = vld [vmem:[#allocation2 + $0x40] sm:$0xf]
    %v163 = vld [vmem:[#allocation2 + $0x44] sm:$0xf]
    %v164 = vld [vmem:[#allocation2 + $0x48] sm:$0xf]
    %v165 = vld [vmem:[#allocation2 + $0x4c] sm:$0xf]
    %v166 = vld [vmem:[#allocation2 + $0x50] sm:$0xf]
    %v167 = vld [vmem:[#allocation2 + $0x54] sm:$0xf]
    %v168 = vld [vmem:[#allocation2 + $0x58] sm:$0xf]
    %v169 = vld [vmem:[#allocation2 + $0x5c] sm:$0xf]
    %v170 = vld [vmem:[#allocation2 + $0x60] sm:$0xf]
    %v171 = vld [vmem:[#allocation2 + $0x64] sm:$0xf]
    %v172 = vld [vmem:[#allocation2 + $0x68] sm:$0xf]
    %v173 = vld [vmem:[#allocation2 + $0x6c] sm:$0xf]
    %v174 = vld [vmem:[#allocation2 + $0x70] sm:$0xf]
    %v175 = vld [vmem:[#allocation2 + $0x74] sm:$0xf]
    %v176 = vld [vmem:[#allocation2 + $0x78] sm:$0xf]
    %v177 = vld [vmem:[#allocation2 + $0x7c] sm:$0xf]
    %v178 = vld [vmem:[#allocation2 + $0x80] sm:$0xf]
    %v179 = vld [vmem:[#allocation2 + $0x84] sm:$0xf]
    %v180 = vld [vmem:[#allocation2 + $0x88] sm:$0xf]
    %v181 = vld [vmem:[#allocation2 + $0x8c] sm:$0xf]
    %v182 = vld [vmem:[#allocation2 + $0x90] sm:$0xf]
    %v183 = vld [vmem:[#allocation2 + $0x94] sm:$0xf]
    %v184 = vld [vmem:[#allocation2 + $0x98] sm:$0xf]
    %v185 = vld [vmem:[#allocation2 + $0x9c] sm:$0xf]
    %v186 = vld [vmem:[#allocation2 + $0xa0] sm:$0xf]
    %v187 = vld [vmem:[#allocation2 + $0xa4] sm:$0xf]
    %v188 = vld [vmem:[#allocation2 + $0xa8] sm:$0xf]
    %v189 = vld [vmem:[#allocation2 + $0xac] sm:$0xf]
    %v190 = vld [vmem:[#allocation2 + $0xb0] sm:$0xf]
    %v191 = vld [vmem:[#allocation2 + $0xb4] sm:$0xf]
    %v192 = vld [vmem:[#allocation2 + $0xb8] sm:$0xf]
    %v193 = vld [vmem:[#allocation2 + $0xbc] sm:$0xf]
    %v194 = vld [vmem:[#allocation2 + $0xc0] sm:$0xf]
    %v195 = vld [vmem:[#allocation2 + $0xc4] sm:$0xf]
    %v196 = vld [vmem:[#allocation2 + $0xc8] sm:$0xf]
    %v197 = vld [vmem:[#allocation2 + $0xcc] sm:$0xf]
    %v198 = vld [vmem:[#allocation2 + $0xd0] sm:$0xf]
    %v199 = vld [vmem:[#allocation2 + $0xd4] sm:$0xf]
    %v200 = vld [vmem:[#allocation2 + $0xd8] sm:$0xf]
    %v201 = vld [vmem:[#allocation2 + $0xdc] sm:$0xf]
    %v202 = vld [vmem:[#allocation2 + $0xe0] sm:$0xf]
    %v203 = vld [vmem:[#allocation2 + $0xe4] sm:$0xf]
    %v204 = vld [vmem:[#allocation2 + $0xe8] sm:$0xf]
    %v205 = vld [vmem:[#allocation2 + $0xec] sm:$0xf]
    %v206 = vld [vmem:[#allocation2 + $0xf0] sm:$0xf]
    %v207 = vld [vmem:[#allocation2 + $0xf4] sm:$0xf]
    %v208 = vld [vmem:[#allocation2 + $0xf8] sm:$0xf]
    %v209 = vld [vmem:[#allocation2 + $0xfc] sm:$0xf]
    %v210 = vld [vmem:[%s2] sm:$0x1]
    %v212 = vlaneseq
    %v213 = vshrl.u32 %v212, 7
    %v214 = vsub.s32 0, %v213
    %v215 = vrot.slane %v210, %v214
    %v281 = vunpack.c.l.b16 %v146
    %v282 = vunpack.c.l.b16 %v147
    %v283 = vunpack.c.l.b16 %v148
    %v284 = vunpack.c.l.b16 %v149
    %v285 = vunpack.c.l.b16 %v150
    %v286 = vunpack.c.l.b16 %v151
    %v287 = vunpack.c.l.b16 %v152
    %v288 = vunpack.c.l.b16 %v153
    %v289 = vunpack.c.l.b16 %v154
    %v290 = vunpack.c.l.b16 %v155
    %v291 = vunpack.c.l.b16 %v156
    %v292 = vunpack.c.l.b16 %v157
    %v293 = vunpack.c.l.b16 %v158
    %v294 = vunpack.c.l.b16 %v159
    %v295 = vunpack.c.l.b16 %v160
    %v296 = vunpack.c.l.b16 %v161
    %v297 = vunpack.c.l.b16 %v162
    %v298 = vunpack.c.l.b16 %v163
    %v299 = vunpack.c.l.b16 %v164
    %v300 = vunpack.c.l.b16 %v165
    %v301 = vunpack.c.l.b16 %v166
    %v302 = vunpack.c.l.b16 %v167
    %v303 = vunpack.c.l.b16 %v168
    %v304 = vunpack.c.l.b16 %v169
    %v305 = vunpack.c.l.b16 %v170
    %v306 = vunpack.c.l.b16 %v171
    %v307 = vunpack.c.l.b16 %v172
    %v308 = vunpack.c.l.b16 %v173
    %v309 = vunpack.c.l.b16 %v174
    %v310 = vunpack.c.l.b16 %v175
    %v311 = vunpack.c.l.b16 %v176
    %v312 = vunpack.c.l.b16 %v177
    %v313 = vunpack.c.l.b16 %v178
    %v314 = vunpack.c.l.b16 %v179
    %v315 = vunpack.c.l.b16 %v180
    %v316 = vunpack.c.l.b16 %v181
    %v317 = vunpack.c.l.b16 %v182
    %v318 = vunpack.c.l.b16 %v183
    %v319 = vunpack.c.l.b16 %v184
    %v320 = vunpack.c.l.b16 %v185
    %v321 = vunpack.c.l.b16 %v186
    %v322 = vunpack.c.l.b16 %v187
    %v323 = vunpack.c.l.b16 %v188
    %v324 = vunpack.c.l.b16 %v189
    %v325 = vunpack.c.l.b16 %v190
    %v326 = vunpack.c.l.b16 %v191
    %v327 = vunpack.c.l.b16 %v192
    %v328 = vunpack.c.l.b16 %v193
    %v329 = vunpack.c.l.b16 %v194
    %v330 = vunpack.c.l.b16 %v195
    %v331 = vunpack.c.l.b16 %v196
    %v332 = vunpack.c.l.b16 %v197
    %v333 = vunpack.c.l.b16 %v198
    %v334 = vunpack.c.l.b16 %v199
    %v335 = vunpack.c.l.b16 %v200
    %v336 = vunpack.c.l.b16 %v201
    %v337 = vunpack.c.l.b16 %v202
    %v338 = vunpack.c.l.b16 %v203
    %v339 = vunpack.c.l.b16 %v204
    %v340 = vunpack.c.l.b16 %v205
    %v341 = vunpack.c.l.b16 %v206
    %v342 = vunpack.c.l.b16 %v207
    %v343 = vunpack.c.l.b16 %v208
    %v344 = vunpack.c.l.b16 %v209
    %v345 = vpack.c.b16 %v282, %v281
    %v346 = vpack.c.b16 %v284, %v283
    %v347 = vpack.c.b16 %v286, %v285
    %v348 = vpack.c.b16 %v288, %v287
    %v349 = vpack.c.b16 %v290, %v289
    %v350 = vpack.c.b16 %v292, %v291
    %v351 = vpack.c.b16 %v294, %v293
    %v352 = vpack.c.b16 %v296, %v295
    %v353 = vpack.c.b16 %v298, %v297
    %v354 = vpack.c.b16 %v300, %v299
    %v355 = vpack.c.b16 %v302, %v301
    %v356 = vpack.c.b16 %v304, %v303
    %v357 = vpack.c.b16 %v306, %v305
    %v358 = vpack.c.b16 %v308, %v307
    %v359 = vpack.c.b16 %v310, %v309
    %v360 = vpack.c.b16 %v312, %v311
    %v361 = vpack.c.b16 %v314, %v313
    %v362 = vpack.c.b16 %v316, %v315
    %v363 = vpack.c.b16 %v318, %v317
    %v364 = vpack.c.b16 %v320, %v319
    %v365 = vpack.c.b16 %v322, %v321
    %v366 = vpack.c.b16 %v324, %v323
    %v367 = vpack.c.b16 %v326, %v325
    %v368 = vpack.c.b16 %v328, %v327
    %v369 = vpack.c.b16 %v330, %v329
    %v370 = vpack.c.b16 %v332, %v331
    %v371 = vpack.c.b16 %v334, %v333
    %v372 = vpack.c.b16 %v336, %v335
    %v373 = vpack.c.b16 %v338, %v337
    %v374 = vpack.c.b16 %v340, %v339
    %v375 = vpack.c.b16 %v342, %v341
    %v376 = vpack.c.b16 %v344, %v343
    %409 = vmatprep.subr.bf16.mxu0 0
    %410 = vmatpush1.bf16.msra.mxu0 %v345
    %411 = vmatprep.subr.bf16.mxu0 0
    %412 = vmatpush1.bf16.msra.mxu0 %v346
    %413 = vmatprep.subr.bf16.mxu0 0
    %414 = vmatpush1.bf16.msra.mxu0 %v347
    %415 = vmatprep.subr.bf16.mxu0 0
    %416 = vmatpush1.bf16.msra.mxu0 %v348
    %417 = vmatprep.subr.bf16.mxu0 0
    %418 = vmatpush1.bf16.msra.mxu0 %v349
    %419 = vmatprep.subr.bf16.mxu0 0
    %420 = vmatpush1.bf16.msra.mxu0 %v350
    %421 = vmatprep.subr.bf16.mxu0 0
    %422 = vmatpush1.bf16.msra.mxu0 %v351
    %423 = vmatprep.subr.bf16.mxu0 0
    %424 = vmatpush1.bf16.msra.mxu0 %v352
    %425 = vmatprep.subr.bf16.mxu0 0
    %426 = vmatpush1.bf16.msra.mxu0 %v353
    %427 = vmatprep.subr.bf16.mxu0 0
    %428 = vmatpush1.bf16.msra.mxu0 %v354
    %429 = vmatprep.subr.bf16.mxu0 0
    %430 = vmatpush1.bf16.msra.mxu0 %v355
    %431 = vmatprep.subr.bf16.mxu0 0
    %432 = vmatpush1.bf16.msra.mxu0 %v356
    %433 = vmatprep.subr.bf16.mxu0 0
    %434 = vmatpush1.bf16.msra.mxu0 %v357
    %435 = vmatprep.subr.bf16.mxu0 0
    %436 = vmatpush1.bf16.msra.mxu0 %v358
    %437 = vmatprep.subr.bf16.mxu0 0
    %438 = vmatpush1.bf16.msra.mxu0 %v359
    %439 = vmatprep.subr.bf16.mxu0 0
    %440 = vmatpush1.bf16.msra.mxu0 %v360
    %441 = vmatprep.mubr.bf16.mxu0 %v143
    %442 = vmatmul.mubr.bf16.gmra.mrb[0].mxu0 %v142
    %v443 = vpop.f32.mrb[0].mxu0
    %v444 = vadd.f32 %v215, %v443
    %v445 = vpop.f32.mrb[0].mxu0
    %v446 = vpop.f32.mrb[0].mxu0
    %v447 = vadd.f32 %v215, %v446
    %v448 = vpop.f32.mrb[0].mxu0
    %449 = vdwg.mxu0
    %450 = vmatprep.subr.bf16.mxu0 0
    %451 = vmatpush1.bf16.msra.mxu0 %v361
    %452 = vmatprep.subr.bf16.mxu0 0
    %453 = vmatpush1.bf16.msra.mxu0 %v362
    %454 = vmatprep.subr.bf16.mxu0 0
    %455 = vmatpush1.bf16.msra.mxu0 %v363
    %456 = vmatprep.subr.bf16.mxu0 0
    %457 = vmatpush1.bf16.msra.mxu0 %v364
    %458 = vmatprep.subr.bf16.mxu0 0
    %459 = vmatpush1.bf16.msra.mxu0 %v365
    %460 = vmatprep.subr.bf16.mxu0 0
    %461 = vmatpush1.bf16.msra.mxu0 %v366
    %462 = vmatprep.subr.bf16.mxu0 0
    %463 = vmatpush1.bf16.msra.mxu0 %v367
    %464 = vmatprep.subr.bf16.mxu0 0
    %465 = vmatpush1.bf16.msra.mxu0 %v368
    %466 = vmatprep.subr.bf16.mxu0 0
    %467 = vmatpush1.bf16.msra.mxu0 %v369
    %468 = vmatprep.subr.bf16.mxu0 0
    %469 = vmatpush1.bf16.msra.mxu0 %v370
    %470 = vmatprep.subr.bf16.mxu0 0
    %471 = vmatpush1.bf16.msra.mxu0 %v371
    %472 = vmatprep.subr.bf16.mxu0 0
    %473 = vmatpush1.bf16.msra.mxu0 %v372
    %474 = vmatprep.subr.bf16.mxu0 0
    %475 = vmatpush1.bf16.msra.mxu0 %v373
    %476 = vmatprep.subr.bf16.mxu0 0
    %477 = vmatpush1.bf16.msra.mxu0 %v374
    %478 = vmatprep.subr.bf16.mxu0 0
    %479 = vmatpush1.bf16.msra.mxu0 %v375
    %480 = vmatprep.subr.bf16.mxu0 0
    %481 = vmatpush1.bf16.msra.mxu0 %v376
    %482 = vmatprep.mubr.bf16.mxu0 %v145
    %483 = vmatmul.mubr.bf16.gmra.mrb[0].mxu0 %v144
    %v484 = vpop.f32.mrb[0].mxu0
    %v485 = vadd.f32 %v444, %v484
    %v486 = vpop.f32.mrb[0].mxu0
    %v487 = vpop.f32.mrb[0].mxu0
    %v488 = vadd.f32 %v447, %v487
    %v489 = vpop.f32.mrb[0].mxu0
    %490 = vdwg.mxu0
    %v491 = vmax.f32 %v485, 0.0
    %v492 = vmax.f32 %v488, 0.0
    %v493 = vpack.c.bf16 %v492, %v491
    %v494 = vld [vmem:[%s3] sm:$0xf]
    %v495 = vld [vmem:[%s3 + $0x4] sm:$0xf]
    %v496 = vld [vmem:[%s3 + $0x8] sm:$0xf]
    %v497 = vld [vmem:[%s3 + $0xc] sm:$0xf]
    %v498 = vld [vmem:[%s3 + $0x10] sm:$0xf]
    %v499 = vld [vmem:[%s3 + $0x14] sm:$0xf]
    %v500 = vld [vmem:[%s3 + $0x18] sm:$0xf]
    %v501 = vld [vmem:[%s3 + $0x1c] sm:$0xf]
    %v502 = vld [vmem:[%s3 + $0x20] sm:$0xf]
    %v503 = vld [vmem:[%s3 + $0x24] sm:$0xf]
    %v504 = vld [vmem:[%s3 + $0x28] sm:$0xf]
    %v505 = vld [vmem:[%s3 + $0x2c] sm:$0xf]
    %v506 = vld [vmem:[%s3 + $0x30] sm:$0xf]
    %v507 = vld [vmem:[%s3 + $0x34] sm:$0xf]
    %v508 = vld [vmem:[%s3 + $0x38] sm:$0xf]
    %v509 = vld [vmem:[%s3 + $0x3c] sm:$0xf]
    %v510 = vld [vmem:[%s4] sm:$0x1]
    %v512 = vlaneseq
    %v513 = vshrl.u32 %v512, 7
    %v514 = vsub.s32 0, %v513
    %v515 = vrot.slane %v510, %v514
    %v533 = vunpack.c.l.b16 %v494
    %v534 = vunpack.c.l.b16 %v495
    %v535 = vunpack.c.l.b16 %v496
    %v536 = vunpack.c.l.b16 %v497
    %v537 = vunpack.c.l.b16 %v498
    %v538 = vunpack.c.l.b16 %v499
    %v539 = vunpack.c.l.b16 %v500
    %v540 = vunpack.c.l.b16 %v501
    %v541 = vunpack.c.l.b16 %v502
    %v542 = vunpack.c.l.b16 %v503
    %v543 = vunpack.c.l.b16 %v504
    %v544 = vunpack.c.l.b16 %v505
    %v545 = vunpack.c.l.b16 %v506
    %v546 = vunpack.c.l.b16 %v507
    %v547 = vunpack.c.l.b16 %v508
    %v548 = vunpack.c.l.b16 %v509
    %v549 = vpack.c.b16 %v534, %v533
    %v550 = vpack.c.b16 %v536, %v535
    %v551 = vpack.c.b16 %v538, %v537
    %v552 = vpack.c.b16 %v540, %v539
    %v553 = vpack.c.b16 %v542, %v541
    %v554 = vpack.c.b16 %v544, %v543
    %v555 = vpack.c.b16 %v546, %v545
    %v556 = vpack.c.b16 %v548, %v547
    %565 = vmatprep.subr.bf16.mxu0 0
    %566 = vmatpush1.bf16.msra.mxu0 %v549
    %567 = vmatprep.subr.bf16.mxu0 0
    %568 = vmatpush1.bf16.msra.mxu0 %v550
    %569 = vmatprep.subr.bf16.mxu0 0
    %570 = vmatpush1.bf16.msra.mxu0 %v551
    %571 = vmatprep.subr.bf16.mxu0 0
    %572 = vmatpush1.bf16.msra.mxu0 %v552
    %573 = vmatprep.subr.bf16.mxu0 0
    %574 = vmatpush1.bf16.msra.mxu0 %v553
    %575 = vmatprep.subr.bf16.mxu0 0
    %576 = vmatpush1.bf16.msra.mxu0 %v554
    %577 = vmatprep.subr.bf16.mxu0 0
    %578 = vmatpush1.bf16.msra.mxu0 %v555
    %579 = vmatprep.subr.bf16.mxu0 0
    %580 = vmatpush1.bf16.msra.mxu0 %v556
    %581 = vmatprep.subr.bf16.mxu0 0
    %582 = vmatpush1.bf16.msra.mxu0 0
    %583 = vmatprep.subr.bf16.mxu0 0
    %584 = vmatpush1.bf16.msra.mxu0 0
    %585 = vmatprep.subr.bf16.mxu0 0
    %586 = vmatpush1.bf16.msra.mxu0 0
    %587 = vmatprep.subr.bf16.mxu0 0
    %588 = vmatpush1.bf16.msra.mxu0 0
    %589 = vmatprep.subr.bf16.mxu0 0
    %590 = vmatpush1.bf16.msra.mxu0 0
    %591 = vmatprep.subr.bf16.mxu0 0
    %592 = vmatpush1.bf16.msra.mxu0 0
    %593 = vmatprep.subr.bf16.mxu0 0
    %594 = vmatpush1.bf16.msra.mxu0 0
    %595 = vmatprep.subr.bf16.mxu0 0
    %596 = vmatpush1.bf16.msra.mxu0 0
    %597 = vmatprep.mubr.bf16.mxu0 0
    %598 = vmatmul.mubr.bf16.gmra.mrb[0].mxu0 %v493
    %v599 = vpop.f32.mrb[0].mxu0
    %v600 = vadd.f32 %v515, %v599
    %v601 = vpop.f32.mrb[0].mxu0
    %v602 = vpop.f32.mrb[0].mxu0
    %v603 = vadd.f32 %v515, %v602
    %v604 = vpop.f32.mrb[0].mxu0
    %605 = vdwg.mxu0
    %v606 = vmax.f32 %v600, 0.0
    %v607 = vmax.f32 %v603, 0.0
    %v608 = vpack.c.bf16 %v607, %v606
    %v609 = vld [vmem:[#allocation4] sm:$0xf]
    %v610 = vld [vmem:[#allocation4 + $0x4] sm:$0xf]
    %v611 = vld [vmem:[#allocation4 + $0x8] sm:$0xf]
    %v612 = vld [vmem:[#allocation4 + $0xc] sm:$0xf]
    %v613 = vld [vmem:[#allocation4 + $0x10] sm:$0xf]
    %v614 = vld [vmem:[#allocation4 + $0x14] sm:$0xf]
    %v615 = vld [vmem:[#allocation4 + $0x18] sm:$0xf]
    %v616 = vld [vmem:[#allocation4 + $0x1c] sm:$0xf]
    %v617 = vld [vmem:[#allocation4 + $0x20] sm:$0xf]
    %v618 = vld [vmem:[#allocation4 + $0x24] sm:$0xf]
    %v619 = vld [vmem:[#allocation4 + $0x28] sm:$0xf]
    %v620 = vld [vmem:[#allocation4 + $0x2c] sm:$0xf]
    %v621 = vld [vmem:[#allocation4 + $0x30] sm:$0xf]
    %v622 = vld [vmem:[#allocation4 + $0x34] sm:$0xf]
    %v623 = vld [vmem:[#allocation4 + $0x38] sm:$0xf]
    %v624 = vld [vmem:[#allocation4 + $0x3c] sm:$0xf]
    %v625 = vld [vmem:[#allocation6] sm:$0x1]
    %v627 = vlaneseq
    %v628 = vshrl.u32 %v627, 7
    %v629 = vsub.s32 0, %v628
    %v630 = vrot.slane %v625, %v629
    %v648 = vunpack.c.l.b16 %v609
    %v649 = vunpack.c.l.b16 %v610
    %v650 = vunpack.c.l.b16 %v611
    %v651 = vunpack.c.l.b16 %v612
    %v652 = vunpack.c.l.b16 %v613
    %v653 = vunpack.c.l.b16 %v614
    %v654 = vunpack.c.l.b16 %v615
    %v655 = vunpack.c.l.b16 %v616
    %v656 = vunpack.c.l.b16 %v617
    %v657 = vunpack.c.l.b16 %v618
    %v658 = vunpack.c.l.b16 %v619
    %v659 = vunpack.c.l.b16 %v620
    %v660 = vunpack.c.l.b16 %v621
    %v661 = vunpack.c.l.b16 %v622
    %v662 = vunpack.c.l.b16 %v623
    %v663 = vunpack.c.l.b16 %v624
    %v664 = vpack.c.b16 %v649, %v648
    %v665 = vpack.c.b16 %v651, %v650
    %v666 = vpack.c.b16 %v653, %v652
    %v667 = vpack.c.b16 %v655, %v654
    %v668 = vpack.c.b16 %v657, %v656
    %v669 = vpack.c.b16 %v659, %v658
    %v670 = vpack.c.b16 %v661, %v660
    %v671 = vpack.c.b16 %v663, %v662
    %680 = vmatprep.subr.bf16.mxu0 0
    %681 = vmatpush1.bf16.msra.mxu0 %v664
    %682 = vmatprep.subr.bf16.mxu0 0
    %683 = vmatpush1.bf16.msra.mxu0 %v665
    %684 = vmatprep.subr.bf16.mxu0 0
    %685 = vmatpush1.bf16.msra.mxu0 %v666
    %686 = vmatprep.subr.bf16.mxu0 0
    %687 = vmatpush1.bf16.msra.mxu0 %v667
    %688 = vmatprep.subr.bf16.mxu0 0
    %689 = vmatpush1.bf16.msra.mxu0 %v668
    %690 = vmatprep.subr.bf16.mxu0 0
    %691 = vmatpush1.bf16.msra.mxu0 %v669
    %692 = vmatprep.subr.bf16.mxu0 0
    %693 = vmatpush1.bf16.msra.mxu0 %v670
    %694 = vmatprep.subr.bf16.mxu0 0
    %695 = vmatpush1.bf16.msra.mxu0 %v671
    %696 = vmatprep.subr.bf16.mxu0 0
    %697 = vmatpush1.bf16.msra.mxu0 0
    %698 = vmatprep.subr.bf16.mxu0 0
    %699 = vmatpush1.bf16.msra.mxu0 0
    %700 = vmatprep.subr.bf16.mxu0 0
    %701 = vmatpush1.bf16.msra.mxu0 0
    %702 = vmatprep.subr.bf16.mxu0 0
    %703 = vmatpush1.bf16.msra.mxu0 0
    %704 = vmatprep.subr.bf16.mxu0 0
    %705 = vmatpush1.bf16.msra.mxu0 0
    %706 = vmatprep.subr.bf16.mxu0 0
    %707 = vmatpush1.bf16.msra.mxu0 0
    %708 = vmatprep.subr.bf16.mxu0 0
    %709 = vmatpush1.bf16.msra.mxu0 0
    %710 = vmatprep.subr.bf16.mxu0 0
    %711 = vmatpush1.bf16.msra.mxu0 0
    %712 = vmatprep.mubr.bf16.mxu0 0
    %713 = vmatmul.mubr.bf16.gmra.mrb[0].mxu0 %v608
    %v714 = vpop.f32.mrb[0].mxu0
    %v715 = vadd.f32 %v630, %v714
    %v716 = vpop.f32.mrb[0].mxu0
    %v717 = vpop.f32.mrb[0].mxu0
    %v718 = vadd.f32 %v630, %v717
    %v719 = vpop.f32.mrb[0].mxu0
    %720 = vdwg.mxu0
    %v721 = vmax.f32 %v715, 0.0
    %v722 = vmax.f32 %v718, 0.0
    %v723 = vpack.c.bf16 %v722, %v721
    %v724 = vld [vmem:[#allocation7] sm:$0xf]
    %v725 = vld [vmem:[#allocation7 + $0x4] sm:$0xf]
    %v726 = vld [vmem:[#allocation7 + $0x8] sm:$0xf]
    %v727 = vld [vmem:[#allocation7 + $0xc] sm:$0xf]
    %v728 = vld [vmem:[#allocation7 + $0x10] sm:$0xf]
    %v729 = vld [vmem:[#allocation7 + $0x14] sm:$0xf]
    %v730 = vld [vmem:[#allocation7 + $0x18] sm:$0xf]
    %v731 = vld [vmem:[#allocation7 + $0x1c] sm:$0xf]
    %v732 = vld [vmem:[#allocation7 + $0x20] sm:$0xf]
    %v733 = vld [vmem:[#allocation7 + $0x24] sm:$0xf]
    %v734 = vld [vmem:[#allocation7 + $0x28] sm:$0xf]
    %v735 = vld [vmem:[#allocation7 + $0x2c] sm:$0xf]
    %v736 = vld [vmem:[#allocation7 + $0x30] sm:$0xf]
    %v737 = vld [vmem:[#allocation7 + $0x34] sm:$0xf]
    %v738 = vld [vmem:[#allocation7 + $0x38] sm:$0xf]
    %v739 = vld [vmem:[#allocation7 + $0x3c] sm:$0xf]
    %v740 = vld [vmem:[#allocation9] sm:$0x1]
    %v742 = vlaneseq
    %v743 = vshrl.u32 %v742, 7
    %v744 = vsub.s32 0, %v743
    %v745 = vrot.slane %v740, %v744
    %v763 = vunpack.c.l.b16 %v724
    %v764 = vunpack.c.l.b16 %v725
    %v765 = vunpack.c.l.b16 %v726
    %v766 = vunpack.c.l.b16 %v727
    %v767 = vunpack.c.l.b16 %v728
    %v768 = vunpack.c.l.b16 %v729
    %v769 = vunpack.c.l.b16 %v730
    %v770 = vunpack.c.l.b16 %v731
    %v771 = vunpack.c.l.b16 %v732
    %v772 = vunpack.c.l.b16 %v733
    %v773 = vunpack.c.l.b16 %v734
    %v774 = vunpack.c.l.b16 %v735
    %v775 = vunpack.c.l.b16 %v736
    %v776 = vunpack.c.l.b16 %v737
    %v777 = vunpack.c.l.b16 %v738
    %v778 = vunpack.c.l.b16 %v739
    %v779 = vpack.c.b16 %v764, %v763
    %v780 = vpack.c.b16 %v766, %v765
    %v781 = vpack.c.b16 %v768, %v767
    %v782 = vpack.c.b16 %v770, %v769
    %v783 = vpack.c.b16 %v772, %v771
    %v784 = vpack.c.b16 %v774, %v773
    %v785 = vpack.c.b16 %v776, %v775
    %v786 = vpack.c.b16 %v778, %v777
    %795 = vmatprep.subr.bf16.mxu0 0
    %796 = vmatpush1.bf16.msra.mxu0 %v779
    %797 = vmatprep.subr.bf16.mxu0 0
    %798 = vmatpush1.bf16.msra.mxu0 %v780
    %799 = vmatprep.subr.bf16.mxu0 0
    %800 = vmatpush1.bf16.msra.mxu0 %v781
    %801 = vmatprep.subr.bf16.mxu0 0
    %802 = vmatpush1.bf16.msra.mxu0 %v782
    %803 = vmatprep.subr.bf16.mxu0 0
    %804 = vmatpush1.bf16.msra.mxu0 %v783
    %805 = vmatprep.subr.bf16.mxu0 0
    %806 = vmatpush1.bf16.msra.mxu0 %v784
    %807 = vmatprep.subr.bf16.mxu0 0
    %808 = vmatpush1.bf16.msra.mxu0 %v785
    %809 = vmatprep.subr.bf16.mxu0 0
    %810 = vmatpush1.bf16.msra.mxu0 %v786
    %811 = vmatprep.subr.bf16.mxu0 0
    %812 = vmatpush1.bf16.msra.mxu0 0
    %813 = vmatprep.subr.bf16.mxu0 0
    %814 = vmatpush1.bf16.msra.mxu0 0
    %815 = vmatprep.subr.bf16.mxu0 0
    %816 = vmatpush1.bf16.msra.mxu0 0
    %817 = vmatprep.subr.bf16.mxu0 0
    %818 = vmatpush1.bf16.msra.mxu0 0
    %819 = vmatprep.subr.bf16.mxu0 0
    %820 = vmatpush1.bf16.msra.mxu0 0
    %821 = vmatprep.subr.bf16.mxu0 0
    %822 = vmatpush1.bf16.msra.mxu0 0
    %823 = vmatprep.subr.bf16.mxu0 0
    %824 = vmatpush1.bf16.msra.mxu0 0
    %825 = vmatprep.subr.bf16.mxu0 0
    %826 = vmatpush1.bf16.msra.mxu0 0
    %827 = vmatprep.mubr.bf16.mxu0 0
    %828 = vmatmul.mubr.bf16.gmra.mrb[0].mxu0 %v723
    %v829 = vpop.f32.mrb[0].mxu0
    %v830 = vadd.f32 %v745, %v829
    %v831 = vpop.f32.mrb[0].mxu0
    %v832 = vpop.f32.mrb[0].mxu0
    %v833 = vadd.f32 %v745, %v832
    %v834 = vpop.f32.mrb[0].mxu0
    %835 = vdwg.mxu0
    %v836 = vmax.f32 %v830, 0.0
    %v837 = vmax.f32 %v833, 0.0
    %v838 = vpack.c.bf16 %v837, %v836
    %v839 = vld [vmem:[%s9] sm:$0xf]
    %v840 = vld [vmem:[%s9 + $0x4] sm:$0xf]
    %v841 = vld [vmem:[%s9 + $0x8] sm:$0xf]
    %v842 = vld [vmem:[%s9 + $0xc] sm:$0xf]
    %v843 = vld [vmem:[%s9 + $0x10] sm:$0xf]
    %v844 = vld [vmem:[%s9 + $0x14] sm:$0xf]
    %v845 = vld [vmem:[%s9 + $0x18] sm:$0xf]
    %v846 = vld [vmem:[%s9 + $0x1c] sm:$0xf]
    %v847 = vld [vmem:[%s9 + $0x20] sm:$0xf]
    %v848 = vld [vmem:[%s9 + $0x24] sm:$0xf]
    %v849 = vld [vmem:[%s9 + $0x28] sm:$0xf]
    %v850 = vld [vmem:[%s9 + $0x2c] sm:$0xf]
    %v851 = vld [vmem:[%s9 + $0x30] sm:$0xf]
    %v852 = vld [vmem:[%s9 + $0x34] sm:$0xf]
    %v853 = vld [vmem:[%s9 + $0x38] sm:$0xf]
    %v854 = vld [vmem:[%s9 + $0x3c] sm:$0xf]
    %v855 = vld [vmem:[#allocation10] sm:$0x1]
    %v857 = vlaneseq
    %v858 = vshrl.u32 %v857, 7
    %v859 = vsub.s32 0, %v858
    %v860 = vrot.slane %v855, %v859
    %v878 = vunpack.c.l.b16 %v839
    %v879 = vunpack.c.l.b16 %v840
    %v880 = vunpack.c.l.b16 %v841
    %v881 = vunpack.c.l.b16 %v842
    %v882 = vunpack.c.l.b16 %v843
    %v883 = vunpack.c.l.b16 %v844
    %v884 = vunpack.c.l.b16 %v845
    %v885 = vunpack.c.l.b16 %v846
    %v886 = vunpack.c.l.b16 %v847
    %v887 = vunpack.c.l.b16 %v848
    %v888 = vunpack.c.l.b16 %v849
    %v889 = vunpack.c.l.b16 %v850
    %v890 = vunpack.c.l.b16 %v851
    %v891 = vunpack.c.l.b16 %v852
    %v892 = vunpack.c.l.b16 %v853
    %v893 = vunpack.c.l.b16 %v854
    %v894 = vpack.c.b16 %v879, %v878
    %v895 = vpack.c.b16 %v881, %v880
    %v896 = vpack.c.b16 %v883, %v882
    %v897 = vpack.c.b16 %v885, %v884
    %v898 = vpack.c.b16 %v887, %v886
    %v899 = vpack.c.b16 %v889, %v888
    %v900 = vpack.c.b16 %v891, %v890
    %v901 = vpack.c.b16 %v893, %v892
    %910 = vmatprep.subr.bf16.mxu0 0
    %911 = vmatpush1.bf16.msra.mxu0 %v894
    %912 = vmatprep.subr.bf16.mxu0 0
    %913 = vmatpush1.bf16.msra.mxu0 %v895
    %914 = vmatprep.subr.bf16.mxu0 0
    %915 = vmatpush1.bf16.msra.mxu0 %v896
    %916 = vmatprep.subr.bf16.mxu0 0
    %917 = vmatpush1.bf16.msra.mxu0 %v897
    %918 = vmatprep.subr.bf16.mxu0 0
    %919 = vmatpush1.bf16.msra.mxu0 %v898
    %920 = vmatprep.subr.bf16.mxu0 0
    %921 = vmatpush1.bf16.msra.mxu0 %v899
    %922 = vmatprep.subr.bf16.mxu0 0
    %923 = vmatpush1.bf16.msra.mxu0 %v900
    %924 = vmatprep.subr.bf16.mxu0 0
    %925 = vmatpush1.bf16.msra.mxu0 %v901
    %926 = vmatprep.subr.bf16.mxu0 0
    %927 = vmatpush1.bf16.msra.mxu0 0
    %928 = vmatprep.subr.bf16.mxu0 0
    %929 = vmatpush1.bf16.msra.mxu0 0
    %930 = vmatprep.subr.bf16.mxu0 0
    %931 = vmatpush1.bf16.msra.mxu0 0
    %932 = vmatprep.subr.bf16.mxu0 0
    %933 = vmatpush1.bf16.msra.mxu0 0
    %934 = vmatprep.subr.bf16.mxu0 0
    %935 = vmatpush1.bf16.msra.mxu0 0
    %936 = vmatprep.subr.bf16.mxu0 0
    %937 = vmatpush1.bf16.msra.mxu0 0
    %938 = vmatprep.subr.bf16.mxu0 0
    %939 = vmatpush1.bf16.msra.mxu0 0
    %940 = vmatprep.subr.bf16.mxu0 0
    %941 = vmatpush1.bf16.msra.mxu0 0
    %942 = vmatprep.mubr.bf16.mxu0 0
    %943 = vmatmul.mubr.bf16.gmra.mrb[0].mxu0 %v838
    %v944 = vpop.f32.mrb[0].mxu0
    %v945 = vadd.f32 %v860, %v944
    %v946 = vpop.f32.mrb[0].mxu0
    %v947 = vpop.f32.mrb[0].mxu0
    %v948 = vadd.f32 %v860, %v947
    %v949 = vpop.f32.mrb[0].mxu0
    %950 = vdwg.mxu0
    %v951 = vmax.f32 %v945, 0.0
    %v952 = vmax.f32 %v948, 0.0
    %v953 = vpack.c.bf16 %v952, %v951
    %v954 = vld [vmem:[#allocation12] sm:$0xff]
    %v955 = vld [vmem:[#allocation12 + $0x8] sm:$0xff]
    %v956 = vld [vmem:[#allocation12 + $0x10] sm:$0xff]
    %v957 = vld [vmem:[#allocation12 + $0x18] sm:$0xff]
    %v958 = vld [vmem:[#allocation12 + $0x20] sm:$0xff]
    %v959 = vld [vmem:[#allocation12 + $0x28] sm:$0xff]
    %v960 = vld [vmem:[#allocation12 + $0x30] sm:$0xff]
    %v961 = vld [vmem:[#allocation12 + $0x38] sm:$0xff]
    %v962 = vld [vmem:[#allocation12 + $0x40] sm:$0xff]
    %v963 = vld [vmem:[#allocation12 + $0x48] sm:$0xff]
    %v964 = vld [vmem:[#allocation12 + $0x50] sm:$0xff]
    %v965 = vld [vmem:[#allocation12 + $0x58] sm:$0xff]
    %v966 = vld [vmem:[#allocation12 + $0x60] sm:$0xff]
    %v967 = vld [vmem:[#allocation12 + $0x68] sm:$0xff]
    %v968 = vld [vmem:[#allocation12 + $0x70] sm:$0xff]
    %v969 = vld [vmem:[#allocation12 + $0x78] sm:$0xff]
    %v970 = vld [vmem:[#allocation12 + $0x80] sm:$0xff]
    %v971 = vld [vmem:[#allocation12 + $0x88] sm:$0xff]
    %v972 = vld [vmem:[#allocation12 + $0x90] sm:$0xff]
    %v973 = vld [vmem:[#allocation12 + $0x98] sm:$0xff]
    %v974 = vld [vmem:[#allocation12 + $0xa0] sm:$0xff]
    %v975 = vld [vmem:[#allocation12 + $0xa8] sm:$0xff]
    %v976 = vld [vmem:[#allocation12 + $0xb0] sm:$0xff]
    %v977 = vld [vmem:[#allocation12 + $0xb8] sm:$0xff]
    %v978 = vld [vmem:[#allocation12 + $0xc0] sm:$0xff]
    %v979 = vld [vmem:[#allocation12 + $0xc8] sm:$0xff]
    %v980 = vld [vmem:[#allocation12 + $0xd0] sm:$0xff]
    %v981 = vld [vmem:[#allocation12 + $0xd8] sm:$0xff]
    %v982 = vld [vmem:[#allocation12 + $0xe0] sm:$0xff]
    %v983 = vld [vmem:[#allocation12 + $0xe8] sm:$0xff]
    %v984 = vld [vmem:[#allocation12 + $0xf0] sm:$0xff]
    %v985 = vld [vmem:[#allocation12 + $0xf8] sm:$0xff]
    %v986 = vld [vmem:[%s12] sm:$0xf]
    %v988 = vlaneseq
    %v989 = vshrl.u32 %v988, 7
    %v990 = vsub.s32 0, %v989
    %v991 = vrot.slane %v986, %v990
    %v992 = vlaneseq
    %v993 = vshrl.u32 %v992, 7
    %v994 = vsub.s32 1, %v993
    %v995 = vrot.slane %v986, %v994
    %v996 = vlaneseq
    %v997 = vshrl.u32 %v996, 7
    %v998 = vsub.s32 2, %v997
    %v999 = vrot.slane %v986, %v998
    %v1000 = vlaneseq
    %v1001 = vshrl.u32 %v1000, 7
    %v1002 = vsub.s32 3, %v1001
    %v1003 = vrot.slane %v986, %v1002
    %v1040 = vunpack.c.l.b16 %v954
    %v1041 = vunpack.c.h.b16 %v954
    %v1042 = vunpack.c.l.b16 %v955
    %v1043 = vunpack.c.h.b16 %v955
    %v1044 = vunpack.c.l.b16 %v956
    %v1045 = vunpack.c.h.b16 %v956
    %v1046 = vunpack.c.l.b16 %v957
    %v1047 = vunpack.c.h.b16 %v957
    %v1048 = vunpack.c.l.b16 %v958
    %v1049 = vunpack.c.h.b16 %v958
    %v1050 = vunpack.c.l.b16 %v959
    %v1051 = vunpack.c.h.b16 %v959
    %v1052 = vunpack.c.l.b16 %v960
    %v1053 = vunpack.c.h.b16 %v960
    %v1054 = vunpack.c.l.b16 %v961
    %v1055 = vunpack.c.h.b16 %v961
    %v1056 = vunpack.c.l.b16 %v962
    %v1057 = vunpack.c.h.b16 %v962
    %v1058 = vunpack.c.l.b16 %v963
    %v1059 = vunpack.c.h.b16 %v963
    %v1060 = vunpack.c.l.b16 %v964
    %v1061 = vunpack.c.h.b16 %v964
    %v1062 = vunpack.c.l.b16 %v965
    %v1063 = vunpack.c.h.b16 %v965
    %v1064 = vunpack.c.l.b16 %v966
    %v1065 = vunpack.c.h.b16 %v966
    %v1066 = vunpack.c.l.b16 %v967
    %v1067 = vunpack.c.h.b16 %v967
    %v1068 = vunpack.c.l.b16 %v968
    %v1069 = vunpack.c.h.b16 %v968
    %v1070 = vunpack.c.l.b16 %v969
    %v1071 = vunpack.c.h.b16 %v969
    %v1072 = vunpack.c.l.b16 %v970
    %v1073 = vunpack.c.h.b16 %v970
    %v1074 = vunpack.c.l.b16 %v971
    %v1075 = vunpack.c.h.b16 %v971
    %v1076 = vunpack.c.l.b16 %v972
    %v1077 = vunpack.c.h.b16 %v972
    %v1078 = vunpack.c.l.b16 %v973
    %v1079 = vunpack.c.h.b16 %v973
    %v1080 = vunpack.c.l.b16 %v974
    %v1081 = vunpack.c.h.b16 %v974
    %v1082 = vunpack.c.l.b16 %v975
    %v1083 = vunpack.c.h.b16 %v975
    %v1084 = vunpack.c.l.b16 %v976
    %v1085 = vunpack.c.h.b16 %v976
    %v1086 = vunpack.c.l.b16 %v977
    %v1087 = vunpack.c.h.b16 %v977
    %v1088 = vunpack.c.l.b16 %v978
    %v1089 = vunpack.c.h.b16 %v978
    %v1090 = vunpack.c.l.b16 %v979
    %v1091 = vunpack.c.h.b16 %v979
    %v1092 = vunpack.c.l.b16 %v980
    %v1093 = vunpack.c.h.b16 %v980
    %v1094 = vunpack.c.l.b16 %v981
    %v1095 = vunpack.c.h.b16 %v981
    %v1096 = vunpack.c.l.b16 %v982
    %v1097 = vunpack.c.h.b16 %v982
    %v1098 = vunpack.c.l.b16 %v983
    %v1099 = vunpack.c.h.b16 %v983
    %v1100 = vunpack.c.l.b16 %v984
    %v1101 = vunpack.c.h.b16 %v984
    %v1102 = vunpack.c.l.b16 %v985
    %v1103 = vunpack.c.h.b16 %v985
    %v1104 = vpack.c.b16 %v1044, %v1040
    %v1105 = vpack.c.b16 %v1045, %v1041
    %v1106 = vpack.c.b16 %v1046, %v1042
    %v1107 = vpack.c.b16 %v1047, %v1043
    %v1108 = vpack.c.b16 %v1052, %v1048
    %v1109 = vpack.c.b16 %v1053, %v1049
    %v1110 = vpack.c.b16 %v1054, %v1050
    %v1111 = vpack.c.b16 %v1055, %v1051
    %v1112 = vpack.c.b16 %v1060, %v1056
    %v1113 = vpack.c.b16 %v1061, %v1057
    %v1114 = vpack.c.b16 %v1062, %v1058
    %v1115 = vpack.c.b16 %v1063, %v1059
    %v1116 = vpack.c.b16 %v1068, %v1064
    %v1117 = vpack.c.b16 %v1069, %v1065
    %v1118 = vpack.c.b16 %v1070, %v1066
    %v1119 = vpack.c.b16 %v1071, %v1067
    %v1120 = vpack.c.b16 %v1076, %v1072
    %v1121 = vpack.c.b16 %v1077, %v1073
    %v1122 = vpack.c.b16 %v1078, %v1074
    %v1123 = vpack.c.b16 %v1079, %v1075
    %v1124 = vpack.c.b16 %v1084, %v1080
    %v1125 = vpack.c.b16 %v1085, %v1081
    %v1126 = vpack.c.b16 %v1086, %v1082
    %v1127 = vpack.c.b16 %v1087, %v1083
    %v1128 = vpack.c.b16 %v1092, %v1088
    %v1129 = vpack.c.b16 %v1093, %v1089
    %v1130 = vpack.c.b16 %v1094, %v1090
    %v1131 = vpack.c.b16 %v1095, %v1091
    %v1132 = vpack.c.b16 %v1100, %v1096
    %v1133 = vpack.c.b16 %v1101, %v1097
    %v1134 = vpack.c.b16 %v1102, %v1098
    %v1135 = vpack.c.b16 %v1103, %v1099
    %1168 = vmatprep.subr.bf16.mxu0 %v1105
    %1169 = vmatpush1.bf16.msra.mxu0 %v1104
    %1170 = vmatprep.subr.bf16.mxu0 %v1109
    %1171 = vmatpush1.bf16.msra.mxu0 %v1108
    %1172 = vmatprep.subr.bf16.mxu0 %v1113
    %1173 = vmatpush1.bf16.msra.mxu0 %v1112
    %1174 = vmatprep.subr.bf16.mxu0 %v1117
    %1175 = vmatpush1.bf16.msra.mxu0 %v1116
    %1176 = vmatprep.subr.bf16.mxu0 %v1121
    %1177 = vmatpush1.bf16.msra.mxu0 %v1120
    %1178 = vmatprep.subr.bf16.mxu0 %v1125
    %1179 = vmatpush1.bf16.msra.mxu0 %v1124
    %1180 = vmatprep.subr.bf16.mxu0 %v1129
    %1181 = vmatpush1.bf16.msra.mxu0 %v1128
    %1182 = vmatprep.subr.bf16.mxu0 %v1133
    %1183 = vmatpush1.bf16.msra.mxu0 %v1132
    %1184 = vmatprep.subr.bf16.mxu0 0
    %1185 = vmatpush1.bf16.msra.mxu0 0
    %1186 = vmatprep.subr.bf16.mxu0 0
    %1187 = vmatpush1.bf16.msra.mxu0 0
    %1188 = vmatprep.subr.bf16.mxu0 0
    %1189 = vmatpush1.bf16.msra.mxu0 0
    %1190 = vmatprep.subr.bf16.mxu0 0
    %1191 = vmatpush1.bf16.msra.mxu0 0
    %1192 = vmatprep.subr.bf16.mxu0 0
    %1193 = vmatpush1.bf16.msra.mxu0 0
    %1194 = vmatprep.subr.bf16.mxu0 0
    %1195 = vmatpush1.bf16.msra.mxu0 0
    %1196 = vmatprep.subr.bf16.mxu0 0
    %1197 = vmatpush1.bf16.msra.mxu0 0
    %1198 = vmatprep.subr.bf16.mxu0 0
    %1199 = vmatpush1.bf16.msra.mxu0 0
    %1200 = vmatprep.mubr.bf16.mxu0 0
    %1201 = vmatmul.mubr.bf16.gmra.mrb[0].mxu0 %v953
    %v1202 = vpop.f32.mrb[0].mxu0
    %v1203 = vadd.f32 %v991, %v1202
    %v1204 = vpop.f32.mrb[0].mxu0
    %v1205 = vadd.f32 %v995, %v1204
    %v1206 = vpop.f32.mrb[0].mxu0
    %v1207 = vadd.f32 %v991, %v1206
    %v1208 = vpop.f32.mrb[0].mxu0
    %v1209 = vadd.f32 %v995, %v1208
    %1210 = vdwg.mxu0
    %1211 = vmatprep.subr.bf16.mxu0 %v1107
    %1212 = vmatpush1.bf16.msra.mxu0 %v1106
    %1213 = vmatprep.subr.bf16.mxu0 %v1111
    %1214 = vmatpush1.bf16.msra.mxu0 %v1110
    %1215 = vmatprep.subr.bf16.mxu0 %v1115
    %1216 = vmatpush1.bf16.msra.mxu0 %v1114
    %1217 = vmatprep.subr.bf16.mxu0 %v1119
    %1218 = vmatpush1.bf16.msra.mxu0 %v1118
    %1219 = vmatprep.subr.bf16.mxu0 %v1123
    %1220 = vmatpush1.bf16.msra.mxu0 %v1122
    %1221 = vmatprep.subr.bf16.mxu0 %v1127
    %1222 = vmatpush1.bf16.msra.mxu0 %v1126
    %1223 = vmatprep.subr.bf16.mxu0 %v1131
    %1224 = vmatpush1.bf16.msra.mxu0 %v1130
    %1225 = vmatprep.subr.bf16.mxu0 %v1135
    %1226 = vmatpush1.bf16.msra.mxu0 %v1134
    %1227 = vmatprep.subr.bf16.mxu0 0
    %1228 = vmatpush1.bf16.msra.mxu0 0
    %1229 = vmatprep.subr.bf16.mxu0 0
    %1230 = vmatpush1.bf16.msra.mxu0 0
    %1231 = vmatprep.subr.bf16.mxu0 0
    %1232 = vmatpush1.bf16.msra.mxu0 0
    %1233 = vmatprep.subr.bf16.mxu0 0
    %1234 = vmatpush1.bf16.msra.mxu0 0
    %1235 = vmatprep.subr.bf16.mxu0 0
    %1236 = vmatpush1.bf16.msra.mxu0 0
    %1237 = vmatprep.subr.bf16.mxu0 0
    %1238 = vmatpush1.bf16.msra.mxu0 0
    %1239 = vmatprep.subr.bf16.mxu0 0
    %1240 = vmatpush1.bf16.msra.mxu0 0
    %1241 = vmatprep.subr.bf16.mxu0 0
    %1242 = vmatpush1.bf16.msra.mxu0 0
    %1243 = vmatprep.mubr.bf16.mxu0 0
    %1244 = vmatmul.mubr.bf16.gmra.mrb[0].mxu0 %v953
    %v1245 = vpop.f32.mrb[0].mxu0
    %v1246 = vadd.f32 %v999, %v1245
    %v1247 = vpop.f32.mrb[0].mxu0
    %v1248 = vadd.f32 %v1003, %v1247
    %v1249 = vpop.f32.mrb[0].mxu0
    %v1250 = vadd.f32 %v999, %v1249
    %v1251 = vpop.f32.mrb[0].mxu0
    %v1252 = vadd.f32 %v1003, %v1251
    %1253 = vdwg.mxu0
    %v1254 = vmax.f32 %v1203, 0.0
    %v1255 = vmax.f32 %v1205, 0.0
    %v1256 = vmax.f32 %v1246, 0.0
    %v1257 = vmax.f32 %v1248, 0.0
    %v1258 = vmax.f32 %v1207, 0.0
    %v1259 = vmax.f32 %v1209, 0.0
    %v1260 = vmax.f32 %v1250, 0.0
    %v1261 = vmax.f32 %v1252, 0.0
    %1262 = vst [vmem:[%s13] sm:$0xff] %v1254
    %1263 = vst [vmem:[%s13 + $0x8] sm:$0xff] %v1255
    %1264 = vst [vmem:[%s13 + $0x10] sm:$0xff] %v1256
    %1265 = vst [vmem:[%s13 + $0x18] sm:$0xff] %v1257
    %1266 = vst [vmem:[%s13 + $0x20] sm:$0xff] %v1258
    %1267 = vst [vmem:[%s13 + $0x28] sm:$0xff] %v1259
    %1268 = vst [vmem:[%s13 + $0x30] sm:$0xff] %v1260
    %1269 = vst [vmem:[%s13 + $0x38] sm:$0xff] %v1261
    // Predicated region
    $region82: #{mlp_encoder_forward.1} parent=1 // pred_check
      _
    $region83: #{mlp_encoder_forward.1} parent=1 // pred_check_branch
      %1271 = sbr.rel (0) target = $region85
    $region84: #{mlp_encoder_forward.1} parent=1 // pred_region
      _
    $region85: #{mlp_encoder_forward.1} parent=1 // pred_fallthru
      _
    // Predicated region
    $region86: #{mlp_encoder_forward.1} parent=1 // pred_check
      _
    $region87: #{mlp_encoder_forward.1} parent=1 // pred_check_branch
      %1273 = sbr.rel (0) target = $region89
    $region88: #{mlp_encoder_forward.1} parent=1 // pred_region
      _
    $region89: #{mlp_encoder_forward.1} parent=1 // pred_fallthru
      _
    %1274 = vsyncpa [#allocation3], 1
    %1275 = vsyncpa [#allocation5], 1
    %1276 = vsyncpa [#allocation8], 1
    %1277 = vsyncpa [#allocation11], 1

</llo_original>
